<compile_context>
chip_gen: v6e
topology: v6e:2x2x1
jax: 0.10.0
libtpu: 0.0.40
codegen_flags: <defaults>
</compile_context>

<pallas_src>
import jax
import jax.numpy as jnp
from jax.experimental import pallas as pl
from jax.experimental.pallas import tpu as pltpu

INPUT_DIM = 1
OUTPUT_DIM = 1

LANES = 128     # vreg lane width: lane-dense repack target
SUBLANES = 8    # vreg sublane count: row-tile granularity


def _fma_kernel(w_ref, b_ref, x_ref, o_ref):
    # w_ref, b_ref: (1, 1) float32 scalars in SMEM
    # x_ref, o_ref: (tile_rows, LANES) float32 slabs in VMEM
    # Pure VPU multiply-add: out = x * w + b  (no MXU push/pop, no XLU work).
    w = w_ref[0, 0]
    b = b_ref[0, 0]
    o_ref[...] = x_ref[...] * w + b


def _max_tile_rows():
    """Generation-specific block height (rows of 128 f32 lanes)."""
    try:
        kind = jax.devices()[0].device_kind.lower()
    except Exception:  # pragma: no cover - defensive, never expected on TPU
        kind = ""
    if "v7" in kind or "7x" in kind:
        # v7x: ~3.2 TB/s HBM makes the ~0.35us per-step overhead relatively
        # large; 4 MiB blocks (2 in + 2 out double-buffered = 16 MiB) still
        # fit the 32 MiB scoped-VMEM default (physical VMEM is 64 MiB).
        return 8192
    # v5e / v6e: 2 MiB blocks -> 8 MiB total, safely under the 16 / 32 MiB
    # scoped-VMEM defaults while sitting at ~90% of HBM roofline.
    return 4096


def _choose_tile_rows(rows, max_tile):
    """Balanced row tiling; keeps >= 2 blocks so both v7x TCs stay busy."""
    if rows <= 2 * SUBLANES:
        # Tiny input: one full-extent block (block_shape == array dims is
        # always legal, no (8,128) divisibility requirement, no masking).
        return rows
    num_blocks = max(pl.cdiv(rows, max_tile), 2)
    tile = pl.cdiv(rows, num_blocks)
    tile = pl.cdiv(tile, SUBLANES) * SUBLANES   # round up to sublane multiple
    return min(tile, max_tile)


def linear_regression_forward(x, weight, bias):
    """Pallas-backed forward pass of LinearRegressionModel (nn.Linear(1, 1)).

    x:      (N, 1) float32
    weight: (1, 1) float32  (PyTorch [out_dim, in_dim] convention)
    bias:   (1,)   float32
    returns (N, 1) float32
    """
    n, in_dim = x.shape
    out_dim, w_in_dim = weight.shape
    assert in_dim == 1 and out_dim == 1 and w_in_dim == 1, (
        "kernel is specialized for input_dim=1, output_dim=1")

    x = x.astype(jnp.float32)
    w2d = weight.reshape(1, 1).astype(jnp.float32)
    b2d = bias.reshape(1, 1).astype(jnp.float32)

    # --- lane-dense view: (N, 1) -> (rows, 128) ---
    rows = pl.cdiv(n, LANES)
    lane_padded = (rows * LANES) != n
    if lane_padded:
        # Ragged N: pad only up to the next lane multiple (< 128 extra elems).
        # TODO(synk): jnp.pad still re-materializes the array in HBM; a
        # gather-style kernel over the raw (N, 1) layout could avoid it, but
        # is not worth the complexity for a 1x1 linear layer.
        x2d = jnp.pad(x.reshape(-1), (0, rows * LANES - n)).reshape(rows, LANES)
    else:
        # Fast path: pure metadata reshape, zero extra HBM traffic.
        x2d = x.reshape(rows, LANES)

    tile_rows = _choose_tile_rows(rows, _max_tile_rows())
    grid = (pl.cdiv(rows, tile_rows),)   # partial last block handled by Pallas

    n_elems = rows * LANES
    out2d = pl.pallas_call(
        _fma_kernel,
        out_shape=jax.ShapeDtypeStruct((rows, LANES), jnp.float32),
        grid=grid,
        in_specs=[
            pl.BlockSpec(memory_space=pltpu.MemorySpace.SMEM),   # weight scalar
            pl.BlockSpec(memory_space=pltpu.MemorySpace.SMEM),   # bias scalar
            pl.BlockSpec((tile_rows, LANES), lambda i: (i, 0)),  # x slab
        ],
        out_specs=pl.BlockSpec((tile_rows, LANES), lambda i: (i, 0)),
        compiler_params=pltpu.CompilerParams(
            dimension_semantics=("parallel",),  # megacore sharding on v7x
        ),
        cost_estimate=pl.CostEstimate(
            flops=2 * n_elems,
            transcendentals=0,
            bytes_accessed=8 * n_elems,   # read x + write out (f32)
        ),
    )(w2d, b2d, x2d)

    if lane_padded:
        return out2d.reshape(-1)[:n].reshape(n, out_dim)
    return out2d.reshape(n, out_dim)   # free bitcast on the fast path


if __name__ == "__main__":
    key = jax.random.PRNGKey(0)
    kx, kw, kb, kx2, kx3 = jax.random.split(key, 5)

    # Parameter init matching nn.Linear's U(-1/sqrt(in), 1/sqrt(in)) bounds.
    bound = 1.0 / (INPUT_DIM ** 0.5)
    weight = jax.random.uniform(kw, (OUTPUT_DIM, INPUT_DIM), jnp.float32, -bound, bound)
    bias = jax.random.uniform(kb, (OUTPUT_DIM,), jnp.float32, -bound, bound)

    # 1) Tiny batch (8, 1): ragged path, single full-extent block.
    x = jax.random.normal(kx, (8, INPUT_DIM), jnp.float32)
    out = jax.block_until_ready(linear_regression_forward(x, weight, bias))
    ref = x @ weight.T + bias
    assert out.shape == (8, OUTPUT_DIM)
    assert jnp.allclose(out, ref, atol=1e-5, rtol=1e-5)

    # 2) Ragged N (333): tail-pad path.
    x2 = jax.random.normal(kx2, (333, INPUT_DIM), jnp.float32)
    out2 = jax.block_until_ready(linear_regression_forward(x2, weight, bias))
    ref2 = x2 @ weight.T + bias
    assert out2.shape == (333, OUTPUT_DIM)
    assert jnp.allclose(out2, ref2, atol=1e-5, rtol=1e-5)

    # 3) N % 128 == 0 (2560): zero-copy fast path, 2 parallel blocks, partial
    #    last block handled by Pallas masking.
    x3 = jax.random.normal(kx3, (2560, INPUT_DIM), jnp.float32)
    out3 = jax.block_until_ready(linear_regression_forward(x3, weight, bias))
    ref3 = x3 @ weight.T + bias
    assert out3.shape == (2560, OUTPUT_DIM)
    assert jnp.allclose(out3, ref3, atol=1e-5, rtol=1e-5)

    print("KERNEL_OK")
</pallas_src>

<mosaic_0001>
module attributes {stable_mosaic.version = 11 : i64} {
  func.func @_fma_kernel(%arg0: i32, %arg1: memref<1x1xf32, #tpu.memory_space<smem>>, %arg2: memref<1x1xf32, #tpu.memory_space<smem>>, %arg3: memref<1x128xf32, #tpu.memory_space<vmem>>, %arg4: memref<1x128xf32, #tpu.memory_space<vmem>>) attributes {dimension_semantics = [#tpu.dimension_semantics<parallel>], iteration_bounds = array<i64: 1>, scalar_prefetch = 0 : i64, scratch_operands = 0 : i64, tpu.core_type = #tpu.core_type<tc>, window_params = [{transform_indices = @transform_0, window_bounds = array<i64: 1, 1>}, {transform_indices = @transform_1, window_bounds = array<i64: 1, 1>}, {transform_indices = @transform_2, window_bounds = array<i64: 1, 128>}, {transform_indices = @transform_3, window_bounds = array<i64: 1, 128>}]} {
    %c0 = arith.constant 0 : index
    %c0_0 = arith.constant 0 : index
    %0 = memref.load %arg1[%c0, %c0_0] : memref<1x1xf32, #tpu.memory_space<smem>>
    %c0_1 = arith.constant 0 : index
    %c0_2 = arith.constant 0 : index
    %1 = memref.load %arg2[%c0_1, %c0_2] : memref<1x1xf32, #tpu.memory_space<smem>>
    %c0_3 = arith.constant 0 : index
    %c0_4 = arith.constant 0 : index
    %2 = vector.load %arg3[%c0_3, %c0_4] : memref<1x128xf32, #tpu.memory_space<vmem>>, vector<1x128xf32>
    %3 = vector.broadcast %0 : f32 to vector<1x128xf32>
    %4 = arith.mulf %2, %3 : vector<1x128xf32>
    %5 = vector.broadcast %1 : f32 to vector<1x128xf32>
    %6 = arith.addf %4, %5 : vector<1x128xf32>
    %c0_5 = arith.constant 0 : index
    %c0_6 = arith.constant 0 : index
    %7 = vector.load %arg4[%c0_5, %c0_6] : memref<1x128xf32, #tpu.memory_space<vmem>>, vector<1x128xf32>
    tpu.vector_store %arg4[%c0_5, %c0_6], %6 {strides = array<i32>} : memref<1x128xf32, #tpu.memory_space<vmem>>, vector<1x128xf32>,
    return
  }
  func.func @transform_0(%arg0: i32) -> (i32, i32) {
    %c0_i32 = arith.constant 0 : i32
    %c0_i32_0 = arith.constant 0 : i32
    %c0_i32_1 = arith.constant 0 : i32
    return %c0_i32, %c0_i32_0 : i32, i32
  }
  func.func @transform_1(%arg0: i32) -> (i32, i32) {
    %c0_i32 = arith.constant 0 : i32
    %c0_i32_0 = arith.constant 0 : i32
    %c0_i32_1 = arith.constant 0 : i32
    return %c0_i32, %c0_i32_0 : i32, i32
  }
  func.func @transform_2(%arg0: i32) -> (i32, i32) {
    %c0_i32 = arith.constant 0 : i32
    %c0_i32_0 = arith.constant 0 : i32
    return %arg0, %c0_i32 : i32, i32
  }
  func.func @transform_3(%arg0: i32) -> (i32, i32) {
    %c0_i32 = arith.constant 0 : i32
    %c0_i32_0 = arith.constant 0 : i32
    return %arg0, %c0_i32 : i32, i32
  }
}

</mosaic_0001>

<llo_original>
// kernel: tpu_custom_call.1
$region0: #{tpu_custom_call.1}
  #allocation0 [shape = 'u32[]', space=smem, size = 0x4, offset = 0x4, fixed_abs, tag = 'smem constant byte address 0x4 - core index']
  #allocation1 [shape = 'u32[144,128]{1,0:T(1,128)}', space=vmem, size = 0x12000, scoped, tag = 'internal scratch']
  #allocation2 [shape = 'f32[1,1]{1,0:T(1,128)S(6)}', space=smem, size = 0x200, scoped, tag = 'scoped memory for tpu_custom_call.1']
  #allocation3 [shape = 'f32[1,1]{1,0:T(1,128)S(6)}', space=smem, size = 0x200, scoped, tag = 'scoped memory for tpu_custom_call.1']
  %s0 = inlined_call_operand.<no memory space> [shape: f32[1,1], index: 0, kind: input, shape index: {}]
  %s1 = inlined_call_operand.<no memory space> [shape: f32[1,1], index: 1, kind: input, shape index: {}]
  %s2 = inlined_call_operand.vmem [shape: f32[1,128], index: 2, kind: input, shape index: {}]
  %s3 = inlined_call_operand.hbm [shape: f32[1,128], index: 3, kind: output, shape index: {}]
  %s4 = sld [smem:[#allocation0]]
  $region22: #{tpu_custom_call.1} parent=0
    _
  %s6 = ssub.s32 1, %s4
  %s7 = scalar_select 0, %s6, %s4
  %8 = sst [smem:[#allocation2]] %s0
  %9 = sst [smem:[#allocation3]] %s1
  $region1: #{tpu_custom_call.1} parent=0
    #allocation4 [shape = 'u8[512]{0}', space=vmem, size = 0x400, scoped, tag = 'output window, operand 0, single buffered']
    #allocation5 [shape = 's32[1]{0}', space=sflag, size = 0x4, scoped, tag = 'scoped memory for tpu_custom_call.1']
    %10 = vsyncpa [#allocation5], 0
    // Predicated region
    $region2: #{tpu_custom_call.1} parent=1 // pred_check
      _
    $region3: #{tpu_custom_call.1} parent=1 // pred_check_branch
      %12 = sbr.rel (0) target = $region5
    $region4: #{tpu_custom_call.1} parent=1 // pred_region
      _
    $region5: #{tpu_custom_call.1} parent=1 // pred_fallthru
      _
    // Predicated region
    $region6: #{tpu_custom_call.1} parent=1 // pred_check
      _
    $region7: #{tpu_custom_call.1} parent=1 // pred_check_branch
      %14 = sbr.rel (0) target = $region9
    $region8: #{tpu_custom_call.1} parent=1 // pred_region
      _
    $region9: #{tpu_custom_call.1} parent=1 // pred_fallthru
      _
    // Predicated region
    $region10: #{tpu_custom_call.1} parent=1 // pred_check
      _
    $region11: #{tpu_custom_call.1} parent=1 // pred_check_branch
      %16 = sbr.rel (0) target = $region13
    $region12: #{tpu_custom_call.1} parent=1 // pred_region
      _
    $region13: #{tpu_custom_call.1} parent=1 // pred_fallthru
      _
    %s17 = sld [smem:[#allocation2]]
    %s18 = sld [smem:[#allocation3]]
    %v19 = vld [vmem:[%s2] sm:$0x1]
    %v20 = vstv %s17
    %v21 = vmul.f32 %v19, %v20
    %v22 = vstv %s18
    %v23 = vadd.f32 %v21, %v22
    %24 = vst [vmem:[#allocation4] sm:$0x1] %v23
    // Predicated region
    $region14: #{tpu_custom_call.1} parent=1 // pred_check
      _
    $region15: #{tpu_custom_call.1} parent=1 // pred_check_branch
      %26 = sbr.rel (0) target = $region17
    $region16: #{tpu_custom_call.1} parent=1 // pred_region
      %s28 = ssub.s32 16, 16
      %29 = vsyncadd [#allocation5], %s28
      %s31 = sshll.u32 [#allocation4], 4
      %s32 = int_to_ptr.vmem [resolvable:$true] %s31
      %34 = dma.vmem_to_hbm [thread:$0]  %s32, 16, %s3, [#allocation5]
    $region17: #{tpu_custom_call.1} parent=1 // pred_fallthru
      _
    // Predicated region
    $region18: #{tpu_custom_call.1} parent=1 // pred_check
      _
    $region19: #{tpu_custom_call.1} parent=1 // pred_check_branch
      %36 = sbr.rel (0) target = $region21
    $region20: #{tpu_custom_call.1} parent=1 // pred_region
      %37 = dma.done [#allocation5], 16
    $region21: #{tpu_custom_call.1} parent=1 // pred_fallthru
      _
    %38 = vsyncpa [#allocation5], 1

</llo_original>
